<compile_context>
chip_gen: v7x
topology: tpu7x:2x2x1
jax: 0.10.0
libtpu: 0.0.40
codegen_flags: <defaults>
</compile_context>

<pallas_src>
import numpy as np
import jax
import jax.numpy as jnp
from jax.experimental import pallas as pl
from jax.experimental.pallas import tpu as pltpu

_N_OUT = 2      # output columns: 0 = rel_loss, 1 = triple_loss
_LANE = 128     # TPU lane width (VMEM rows pad the last dim to this)
_SUBLANE = 8    # f32 sublane tiling


def _g3_kernel(obj_later_ref, x2_ref, x3_ref, x4_ref, out_ref):
    obj_later = obj_later_ref[...]   # inputs[1]
    x2 = x2_ref[...]                 # inputs[2]
    x3 = x3_ref[...]                 # inputs[3]
    x4 = x4_ref[...]                 # inputs[4]

    # L1 norms along the feature (lane) axis; shape (TILE_B, 1).
    rel = jnp.sum(jnp.abs(x4 - x2), axis=1, keepdims=True)
    triple = jnp.sum(jnp.abs(x3 + x2 - obj_later), axis=1, keepdims=True)

    # Two-lane writeback: column 0 = rel, column 1 = triple (no 128-lane padding).
    lane = jax.lax.broadcasted_iota(jnp.int32, out_ref.shape, 1)
    out_ref[...] = jnp.where(lane == 0, rel, triple)


def _round_up(x, m):
    return ((x + m - 1) // m) * m


def _choose_tile_b(batch, feat):
    """Batch tile: multiple of 8, as large as a conservative (v7x-safe) VMEM
    budget allows with 2x pipeline buffering, counting lane-padded row widths
    and leaving ~25% headroom for Mosaic internal scratch."""
    d_pad = max(_round_up(feat, _LANE), _LANE)        # rows pad to 128 lanes in VMEM
    per_row = 4 * d_pad * 4 + _LANE * 4               # 4 f32 input rows + padded out row
    dbl_per_row = 2 * per_row                         # double-buffered pipeline
    budget = 24 * 1024 * 1024                         # conservative vs v7x 64 MiB phys
    usable = int(budget * 0.75)                       # ~25% headroom
    tile = usable // dbl_per_row
    tile = max(_SUBLANE, min(8192, (tile // _SUBLANE) * _SUBLANE))
    b_pad8 = _round_up(batch, _SUBLANE)
    tile = min(tile, b_pad8)
    # v7x megacore: keep >=2 grid blocks when there is enough work to split.
    if tile >= batch and batch >= 1024:
        tile = max(_SUBLANE, _round_up(pl.cdiv(batch, 2), _SUBLANE))
    footprint = 2 * tile * per_row                    # double-buffered VMEM bytes
    return tile, footprint


def g3_forward(inputs):
    """inputs: sequence of >=5 arrays, each [B, D]. Returns (rel_loss, triple_loss)."""
    obj_later = inputs[1]
    x2 = inputs[2]
    x3 = inputs[3]
    x4 = inputs[4]
    B, D = obj_later.shape

    tile_b, footprint = _choose_tile_b(B, D)
    num_blocks = pl.cdiv(B, tile_b)
    b_pad = num_blocks * tile_b  # rows beyond B are padding, sliced off below

    in_spec = pl.BlockSpec((tile_b, D), lambda i: (i, 0))
    out_spec = pl.BlockSpec((tile_b, _N_OUT), lambda i: (i, 0))

    # Explicit scoped-VMEM limit: footprint + headroom, at least the v5e default,
    # capped safely under v7x's 64 MiB physical VMEM.
    vmem_limit = int(footprint * 1.3) + (1 << 20)
    vmem_limit = max(vmem_limit, 16 << 20)
    vmem_limit = min(vmem_limit, 48 << 20)

    cost = pl.CostEstimate(
        flops=7 * B * D,
        transcendentals=0,
        bytes_accessed=4 * B * D * 4 + b_pad * _N_OUT * 4,
    )

    out = pl.pallas_call(
        _g3_kernel,
        out_shape=jax.ShapeDtypeStruct((b_pad, _N_OUT), jnp.float32),
        grid=(num_blocks,),
        in_specs=[in_spec, in_spec, in_spec, in_spec],
        out_specs=out_spec,
        compiler_params=pltpu.CompilerParams(
            dimension_semantics=("parallel",),
            vmem_limit_bytes=vmem_limit,
        ),
        cost_estimate=cost,
    )(obj_later, x2, x3, x4)

    rel_loss = out[:B, 0]
    triple_loss = out[:B, 1]
    return rel_loss, triple_loss


def init_g3_params(key, dim_in, dim_out):
    """Deterministic init mirroring G3.__init__ (parameters are unused in forward)."""
    k1, k2 = jax.random.split(key)
    query_proj_w = jax.random.normal(k1, (1, dim_in), jnp.float32) * np.sqrt(2.0 / dim_in)
    key_proj_w = jax.random.normal(k2, (dim_out // 3, dim_out), jnp.float32) * np.sqrt(2.0 / dim_out)
    ln_gamma = jnp.ones((dim_in,), jnp.float32)
    ln_beta = jnp.zeros((dim_in,), jnp.float32)
    return dict(query_proj_w=query_proj_w, key_proj_w=key_proj_w,
                ln_gamma=ln_gamma, ln_beta=ln_beta)


if __name__ == "__main__":
    key = jax.random.PRNGKey(0)
    B, dim_in, dim_out = 8, 32, 32

    # Parameters (unused in forward, initialized for module fidelity).
    params = init_g3_params(key, dim_in, dim_out)

    # Forward consumes a list of 5 tensors, each [B, dim_out].
    keys = jax.random.split(jax.random.fold_in(key, 1), 5)
    inputs = [jax.random.normal(k, (B, dim_out), jnp.float32) for k in keys]

    rel_loss, triple_loss = g3_forward(inputs)
    jax.block_until_ready((rel_loss, triple_loss))

    # Reference check (plain JAX).
    ref_triple = jnp.sum(jnp.abs(inputs[3] + inputs[2] - inputs[1]), axis=1)
    ref_rel = jnp.sum(jnp.abs(inputs[4] - inputs[2]), axis=1)
    assert jnp.allclose(rel_loss, ref_rel, atol=1e-5)
    assert jnp.allclose(triple_loss, ref_triple, atol=1e-5)

    print("KERNEL_OK")
</pallas_src>

<mosaic_0001>
module attributes {stable_mosaic.version = 11 : i64} {
  func.func @_g3_kernel(%arg0: i32, %arg1: memref<8x32xf32, #tpu.memory_space<vmem>>, %arg2: memref<8x32xf32, #tpu.memory_space<vmem>>, %arg3: memref<8x32xf32, #tpu.memory_space<vmem>>, %arg4: memref<8x32xf32, #tpu.memory_space<vmem>>, %arg5: memref<8x2xf32, #tpu.memory_space<vmem>>) attributes {dimension_semantics = [#tpu.dimension_semantics<parallel>], iteration_bounds = array<i64: 1>, scalar_prefetch = 0 : i64, scratch_operands = 0 : i64, tpu.core_type = #tpu.core_type<tc>, window_params = [{transform_indices = @transform_0, window_bounds = array<i64: 8, 32>}, {transform_indices = @transform_1, window_bounds = array<i64: 8, 32>}, {transform_indices = @transform_2, window_bounds = array<i64: 8, 32>}, {transform_indices = @transform_3, window_bounds = array<i64: 8, 32>}, {transform_indices = @transform_4, window_bounds = array<i64: 8, 2>}]} {
    %c0 = arith.constant 0 : index
    %c0_0 = arith.constant 0 : index
    %0 = vector.load %arg1[%c0, %c0_0] : memref<8x32xf32, #tpu.memory_space<vmem>>, vector<8x32xf32>
    %c0_1 = arith.constant 0 : index
    %c0_2 = arith.constant 0 : index
    %1 = vector.load %arg2[%c0_1, %c0_2] : memref<8x32xf32, #tpu.memory_space<vmem>>, vector<8x32xf32>
    %c0_3 = arith.constant 0 : index
    %c0_4 = arith.constant 0 : index
    %2 = vector.load %arg3[%c0_3, %c0_4] : memref<8x32xf32, #tpu.memory_space<vmem>>, vector<8x32xf32>
    %c0_5 = arith.constant 0 : index
    %c0_6 = arith.constant 0 : index
    %3 = vector.load %arg4[%c0_5, %c0_6] : memref<8x32xf32, #tpu.memory_space<vmem>>, vector<8x32xf32>
    %4 = arith.subf %3, %1 : vector<8x32xf32>
    %5 = math.absf %4 : vector<8x32xf32>
    %cst = arith.constant dense<0.000000e+00> : vector<8xf32>
    %6 = vector.multi_reduction <add>, %5, %cst [1] : vector<8x32xf32> to vector<8xf32>
    %7 = vector.shape_cast %6 : vector<8xf32> to vector<8x1xf32>
    %8 = arith.addf %2, %1 : vector<8x32xf32>
    %9 = arith.subf %8, %0 : vector<8x32xf32>
    %10 = math.absf %9 : vector<8x32xf32>
    %cst_7 = arith.constant dense<0.000000e+00> : vector<8xf32>
    %11 = vector.multi_reduction <add>, %10, %cst_7 [1] : vector<8x32xf32> to vector<8xf32>
    %12 = vector.shape_cast %11 : vector<8xf32> to vector<8x1xf32>
    %13 = tpu.iota {dimensions = array<i32: 1>} : vector<8x2xi32>
    %c0_i32 = arith.constant 0 : i32
    %14 = vector.broadcast %c0_i32 : i32 to vector<8x2xi32>
    %15 = arith.cmpi eq, %13, %14 : vector<8x2xi32>
    %16 = vector.shape_cast %7 : vector<8x1xf32> to vector<8x1xf32>
    %17 = vector.broadcast %16 : vector<8x1xf32> to vector<8x2xf32>
    %18 = vector.shape_cast %12 : vector<8x1xf32> to vector<8x1xf32>
    %19 = vector.broadcast %18 : vector<8x1xf32> to vector<8x2xf32>
    %20 = arith.select %15, %17, %19 : vector<8x2xi1>, vector<8x2xf32>
    %c0_8 = arith.constant 0 : index
    %c0_9 = arith.constant 0 : index
    %21 = vector.load %arg5[%c0_8, %c0_9] : memref<8x2xf32, #tpu.memory_space<vmem>>, vector<8x2xf32>
    tpu.vector_store %arg5[%c0_8, %c0_9], %20 {strides = array<i32>} : memref<8x2xf32, #tpu.memory_space<vmem>>, vector<8x2xf32>,
    return
  }
  func.func @transform_0(%arg0: i32) -> (i32, i32) {
    %c0_i32 = arith.constant 0 : i32
    %c0_i32_0 = arith.constant 0 : i32
    return %arg0, %c0_i32 : i32, i32
  }
  func.func @transform_1(%arg0: i32) -> (i32, i32) {
    %c0_i32 = arith.constant 0 : i32
    %c0_i32_0 = arith.constant 0 : i32
    return %arg0, %c0_i32 : i32, i32
  }
  func.func @transform_2(%arg0: i32) -> (i32, i32) {
    %c0_i32 = arith.constant 0 : i32
    %c0_i32_0 = arith.constant 0 : i32
    return %arg0, %c0_i32 : i32, i32
  }
  func.func @transform_3(%arg0: i32) -> (i32, i32) {
    %c0_i32 = arith.constant 0 : i32
    %c0_i32_0 = arith.constant 0 : i32
    return %arg0, %c0_i32 : i32, i32
  }
  func.func @transform_4(%arg0: i32) -> (i32, i32) {
    %c0_i32 = arith.constant 0 : i32
    %c0_i32_0 = arith.constant 0 : i32
    return %arg0, %c0_i32 : i32, i32
  }
}

</mosaic_0001>

<llo_original>
// kernel: tpu_custom_call.1
$region0: #{tpu_custom_call.1}
  #allocation0 [shape = 'u32[]', space=smem, size = 0x4, offset = 0x4, fixed_abs, tag = 'smem constant byte address 0x4 - core index']
  #allocation1 [shape = 'u32[144,128]{1,0:T(1,128)}', space=vmem, size = 0x12000, scoped, tag = 'internal scratch']
  %s0 = inlined_call_operand.hbm [shape: f32[8,32], index: 0, kind: input, shape index: {}]
  %s1 = inlined_call_operand.hbm [shape: f32[8,32], index: 1, kind: input, shape index: {}]
  %s2 = inlined_call_operand.hbm [shape: f32[8,32], index: 2, kind: input, shape index: {}]
  %s3 = inlined_call_operand.vmem [shape: f32[8,32], index: 3, kind: input, shape index: {}]
  %s4 = inlined_call_operand.vmem [shape: f32[8,2], index: 4, kind: output, shape index: {}]
  %s5 = sld [smem:[#allocation0]]
  $region38: #{tpu_custom_call.1} parent=0
    _
  %s7 = ssub.s32 1, %s5
  %s8 = scalar_select 0, %s7, %s5
  $region1: #{tpu_custom_call.1} parent=0
    #allocation2 [shape = 'u8[4096]{0}', space=vmem, size = 0x1000, scoped, tag = 'input window, operand 0, single buffered']
    #allocation3 [shape = 's32[1]{0}', space=sflag, size = 0x4, scoped, tag = 'scoped memory for tpu_custom_call.1']
    #allocation4 [shape = 'u8[4096]{0}', space=vmem, size = 0x1000, scoped, tag = 'input window, operand 1, single buffered']
    #allocation5 [shape = 's32[1]{0}', space=sflag, size = 0x4, scoped, tag = 'scoped memory for tpu_custom_call.1']
    #allocation6 [shape = 'u8[4096]{0}', space=vmem, size = 0x1000, scoped, tag = 'input window, operand 2, single buffered']
    %9 = vsyncpa [#allocation3], 0
    %10 = vsyncpa [#allocation5], 0
    // Predicated region
    $region2: #{tpu_custom_call.1} parent=1 // pred_check
      _
    $region3: #{tpu_custom_call.1} parent=1 // pred_check_branch
      %12 = sbr.rel (0) target = $region5
    $region4: #{tpu_custom_call.1} parent=1 // pred_region
      %s14 = ssub.s32 128, 128
      %15 = vsyncadd [#allocation3], %s14
      %s17 = sshll.u32 [#allocation2], 4
      %s18 = int_to_ptr.vmem [resolvable:$true] %s17
      %20 = dma.hbm_to_vmem [thread:$0]  %s0, 128, %s18, [#allocation3]
    $region5: #{tpu_custom_call.1} parent=1 // pred_fallthru
      _
    // Predicated region
    $region6: #{tpu_custom_call.1} parent=1 // pred_check
      _
    $region7: #{tpu_custom_call.1} parent=1 // pred_check_branch
      %22 = sbr.rel (0) target = $region9
    $region8: #{tpu_custom_call.1} parent=1 // pred_region
      %s24 = ssub.s32 128, 128
      %25 = vsyncadd [#allocation5], %s24
      %s27 = sshll.u32 [#allocation4], 4
      %s28 = int_to_ptr.vmem [resolvable:$true] %s27
      %30 = dma.hbm_to_vmem [thread:$0]  %s1, 128, %s28, [#allocation5]
    $region9: #{tpu_custom_call.1} parent=1 // pred_fallthru
      _
    // Predicated region
    $region10: #{tpu_custom_call.1} parent=1 // pred_check
      _
    $region11: #{tpu_custom_call.1} parent=1 // pred_check_branch
      %32 = sbr.rel (0) target = $region13
    $region12: #{tpu_custom_call.1} parent=1 // pred_region
      %s34 = ssub.s32 128, 128
      %35 = vsyncadd [#allocation5], %s34
      %s37 = sshll.u32 [#allocation6], 4
      %s38 = int_to_ptr.vmem [resolvable:$true] %s37
      %40 = dma.hbm_to_vmem [thread:$0]  %s2, 128, %s38, [#allocation5]
    $region13: #{tpu_custom_call.1} parent=1 // pred_fallthru
      _
    // Predicated region
    $region14: #{tpu_custom_call.1} parent=1 // pred_check
      _
    $region15: #{tpu_custom_call.1} parent=1 // pred_check_branch
      %42 = sbr.rel (0) target = $region17
    $region16: #{tpu_custom_call.1} parent=1 // pred_region
      _
    $region17: #{tpu_custom_call.1} parent=1 // pred_fallthru
      _
    // Predicated region
    $region18: #{tpu_custom_call.1} parent=1 // pred_check
      _
    $region19: #{tpu_custom_call.1} parent=1 // pred_check_branch
      %44 = sbr.rel (0) target = $region21
    $region20: #{tpu_custom_call.1} parent=1 // pred_region
      %45 = dma.done [#allocation3], 128
    $region21: #{tpu_custom_call.1} parent=1 // pred_fallthru
      _
    // Predicated region
    $region22: #{tpu_custom_call.1} parent=1 // pred_check
      _
    $region23: #{tpu_custom_call.1} parent=1 // pred_check_branch
      %47 = sbr.rel (0) target = $region25
    $region24: #{tpu_custom_call.1} parent=1 // pred_region
      %48 = dma.done [#allocation5], 128
    $region25: #{tpu_custom_call.1} parent=1 // pred_fallthru
      _
    // Predicated region
    $region26: #{tpu_custom_call.1} parent=1 // pred_check
      _
    $region27: #{tpu_custom_call.1} parent=1 // pred_check_branch
      %50 = sbr.rel (0) target = $region29
    $region28: #{tpu_custom_call.1} parent=1 // pred_region
      %51 = dma.done [#allocation5], 128
    $region29: #{tpu_custom_call.1} parent=1 // pred_fallthru
      _
    %v52 = vld [vmem:[#allocation2] sm:$0xff]
    %v53 = vld [vmem:[#allocation4] sm:$0xff]
    %v54 = vld [vmem:[#allocation6] sm:$0xff]
    %v55 = vld [vmem:[%s3] sm:$0xff]
    %v56 = vsub.f32 %v55, %v53
    %v57 = vand.u32 2147483647, %v56
    %vm58 = vcmask 261120
    %v59 = vsel %vm58, %v57, 0.0
    %60 = vadd.xlane.f32.xlu0 %v59
    %v61 = vpop.xlane.xlu0 %60
    %v62 = vadd.f32 %v54, %v53
    %v63 = vsub.f32 %v62, %v52
    %v64 = vand.u32 2147483647, %v63
    %v65 = vsel %vm58, %v64, 0.0
    %66 = vadd.xlane.f32.xlu0 %v65
    %v67 = vpop.xlane.xlu0 %66
    %v68 = vlaneseq
    %v69 = vand.u32 %v68, 127
    %vm70 = vcmp.eq.s32.totalorder %v69, 0
    %v71 = vsel %vm70, %v61, %v67
    %vm72 = vcmask 15360
    %73 = vst.msk [vmem:[%s4] sm:$0xff] %vm72, %v71
    // Predicated region
    $region30: #{tpu_custom_call.1} parent=1 // pred_check
      _
    $region31: #{tpu_custom_call.1} parent=1 // pred_check_branch
      %75 = sbr.rel (0) target = $region33
    $region32: #{tpu_custom_call.1} parent=1 // pred_region
      _
    $region33: #{tpu_custom_call.1} parent=1 // pred_fallthru
      _
    // Predicated region
    $region34: #{tpu_custom_call.1} parent=1 // pred_check
      _
    $region35: #{tpu_custom_call.1} parent=1 // pred_check_branch
      %77 = sbr.rel (0) target = $region37
    $region36: #{tpu_custom_call.1} parent=1 // pred_region
      _
    $region37: #{tpu_custom_call.1} parent=1 // pred_fallthru
      _
    %78 = vsyncpa [#allocation3], 1
    %79 = vsyncpa [#allocation5], 1

</llo_original>
